<compile_context>
chip_gen: v6e
topology: v6e:2x2x1
jax: 0.10.0
libtpu: 0.0.40
codegen_flags: <defaults>
</compile_context>

<pallas_src>
import functools
import math

import jax
import jax.numpy as jnp
from jax.experimental import pallas as pl
from jax.experimental.pallas import tpu as pltpu

_LANES = 128


def _vmem_budget():
    """Generation-aware scoped-VMEM limit and the slice the tile chooser may
    plan against (double-buffered in/out tiles + f32 working set)."""
    cap = 64 * 1024 * 1024  # safest (v7x) fallback if the query fails
    try:
        info = pltpu.get_tpu_info()
        cap = int(getattr(info, "vmem_capacity_bytes", cap) or cap)
    except Exception:
        pass
    # 128 MiB physical (v5e/v6e) -> 64 MiB scoped; 64 MiB physical (v7x) -> 32 MiB.
    limit = min(cap // 2, 64 * 1024 * 1024)
    budget = limit // 2  # headroom for compiler temporaries / resident params
    return limit, budget


def _choose_row_tile(rows, lane_width, itemsize, budget):
    """Row tile so that double-buffered in+out tiles plus the f32 working set
    fit in `budget` bytes, while keeping >=2 (ideally more) grid blocks so the
    single 'parallel' axis can be sharded across v7x's two TensorCores."""
    mult = 8 if itemsize >= 4 else 32 // itemsize  # sublane packing multiple
    if rows <= mult:
        return rows  # one block, exact fit

    # per row: 2 buffers x (in + out) at native dtype + ~6 f32 temporaries
    bytes_per_row = lane_width * (4 * itemsize + 6 * 4)
    tm = budget // max(bytes_per_row, 1)
    tm = max(mult, (tm // mult) * mult)
    tm = min(tm, 2048)

    max_blocks = rows // mult
    if max_blocks >= 2:
        # At least 2 blocks (v7x megacore); split further only while tiles
        # stay large enough that per-step overhead remains hidden.
        cap = max((rows // 2 // mult) * mult, mult)
        eighth = (rows // 8 // mult) * mult
        if eighth >= 1024:
            cap = eighth
        tm = min(tm, cap)

    tm = min(tm, (rows // mult) * mult)
    return max(tm, mult)


def _layernorm_kernel(x_ref, a_ref, b_ref, o_ref, *, eps, features):
    """Plain path (features >= 128, or features does not divide 128)."""
    x = x_ref[...].astype(jnp.float32)
    a = a_ref[...].astype(jnp.float32)
    b = b_ref[...].astype(jnp.float32)

    s1 = jnp.sum(x, axis=-1, keepdims=True)
    s2 = jnp.sum(x * x, axis=-1, keepdims=True)

    mean = s1 * jnp.float32(1.0 / features)
    # PyTorch x.std() default is the unbiased estimator (divide by N-1).
    var = (s2 - s1 * mean) * jnp.float32(1.0 / max(features - 1, 1))
    var = jnp.maximum(var, 0.0)  # guard tiny negatives from cancellation
    std = jnp.sqrt(var)
    inv = pl.reciprocal(std + jnp.float32(eps), approx=False)  # EUP, per row

    o_ref[...] = ((x - mean) * inv * a + b).astype(o_ref.dtype)


def _layernorm_kernel_folded(x_ref, a_ref, b_ref, seg_ref, o_ref, *, eps, features):
    """Lane-dense path for features < 128: each kernel row packs
    G = 128 // features logical rows.  Per-segment sums are computed with a
    block-diagonal ones matmul on the otherwise-idle MXU, so every vreg and
    every store stays 128-lane dense (unmasked vst)."""
    x = x_ref[...].astype(jnp.float32)   # (TM, 128) lane-dense
    a = a_ref[...].astype(jnp.float32)   # (1, 128)  params tiled G times
    b = b_ref[...].astype(jnp.float32)
    seg = seg_ref[...]                   # (128, 128) block-diagonal ones, f32

    hi = jax.lax.Precision.HIGHEST       # keep f32 accuracy in the statistics
    s1 = jnp.dot(x, seg, precision=hi, preferred_element_type=jnp.float32)
    s2 = jnp.dot(x * x, seg, precision=hi, preferred_element_type=jnp.float32)

    mean = s1 * jnp.float32(1.0 / features)
    var = (s2 - s1 * mean) * jnp.float32(1.0 / max(features - 1, 1))
    var = jnp.maximum(var, 0.0)
    std = jnp.sqrt(var)
    inv = pl.reciprocal(std + jnp.float32(eps), approx=False)

    o_ref[...] = ((x - mean) * inv * a + b).astype(o_ref.dtype)


def layer_norm(x, a_2, b_2, eps=1e-6, row_tile=None):
    """x: (..., features); a_2, b_2: (features,). Returns same shape/dtype."""
    orig_shape = x.shape
    features = orig_shape[-1]
    rows = math.prod(orig_shape[:-1]) if len(orig_shape) > 1 else 1
    itemsize = jnp.dtype(x.dtype).itemsize
    mult = 8 if itemsize >= 4 else 32 // itemsize
    vmem_limit, vmem_budget = _vmem_budget()

    use_folded = (
        features < _LANES
        and _LANES % features == 0
        and rows % (_LANES // features) == 0
    )

    if use_folded:
        G = _LANES // features
        L = G * features                       # == 128, lane-dense
        rows_f0 = rows // G                    # folded row count
        x_f = x.reshape(rows_f0, L)

        rows_f = rows_f0
        if rows_f < mult:                      # tiny input: pad to the sublane multiple
            x_f = jnp.concatenate(
                [x_f, jnp.zeros((mult - rows_f, L), x.dtype)], axis=0)
            rows_f = mult

        a_f = jnp.tile(a_2.reshape(1, features), (1, G))
        b_f = jnp.tile(b_2.reshape(1, features), (1, G))
        seg_idx = jnp.arange(L) // features
        seg = (seg_idx[:, None] == seg_idx[None, :]).astype(jnp.float32)

        tm = (row_tile if row_tile is not None
              else _choose_row_tile(rows_f, L, itemsize, vmem_budget))
        kernel = functools.partial(_layernorm_kernel_folded,
                                   eps=eps, features=features)
        cost = pl.CostEstimate(
            flops=4 * rows_f * L * L + 10 * rows * features,
            transcendentals=2 * rows,              # sqrt + reciprocal per row
            bytes_accessed=2 * rows * features * itemsize + (L * L + 2 * L) * 4,
        )

        out = pl.pallas_call(
            kernel,
            out_shape=jax.ShapeDtypeStruct((rows_f, L), x.dtype),
            grid=(pl.cdiv(rows_f, tm),),
            in_specs=[
                pl.BlockSpec((tm, L), lambda i: (i, 0)),
                pl.BlockSpec((1, L), lambda i: (0, 0)),      # resident params
                pl.BlockSpec((1, L), lambda i: (0, 0)),
                pl.BlockSpec((L, L), lambda i: (0, 0)),      # resident seg matrix
            ],
            out_specs=pl.BlockSpec((tm, L), lambda i: (i, 0)),
            compiler_params=pltpu.CompilerParams(
                dimension_semantics=("parallel",),
                vmem_limit_bytes=vmem_limit,
            ),
            cost_estimate=cost,
        )(x_f, a_f, b_f, seg)

        if rows_f != rows_f0:
            out = out[:rows_f0]
        return out.reshape(orig_shape)

    # Fallback: features >= 128 (lane-dense when F % 128 == 0) or F ∤ 128.
    x2 = x.reshape(rows, features)
    a2 = a_2.reshape(1, features)
    b2 = b_2.reshape(1, features)

    tm = (row_tile if row_tile is not None
          else _choose_row_tile(rows, features, itemsize, vmem_budget))
    kernel = functools.partial(_layernorm_kernel, eps=eps, features=features)
    cost = pl.CostEstimate(
        flops=10 * rows * features,
        transcendentals=2 * rows,
        bytes_accessed=2 * rows * features * itemsize + 2 * features * 4,
    )

    out = pl.pallas_call(
        kernel,
        out_shape=jax.ShapeDtypeStruct((rows, features), x.dtype),
        grid=(pl.cdiv(rows, tm),),                  # ragged last block is clipped
        in_specs=[
            pl.BlockSpec((tm, features), lambda i: (i, 0)),
            pl.BlockSpec((1, features), lambda i: (0, 0)),
            pl.BlockSpec((1, features), lambda i: (0, 0)),
        ],
        out_specs=pl.BlockSpec((tm, features), lambda i: (i, 0)),
        compiler_params=pltpu.CompilerParams(
            dimension_semantics=("parallel",),
            vmem_limit_bytes=vmem_limit,
        ),
        cost_estimate=cost,
    )(x2, a2, b2)

    return out.reshape(orig_shape)


if __name__ == "__main__":
    key = jax.random.PRNGKey(0)
    batch, seq, hidden = 2, 8, 32   # features = hidden = 32 -> lane-dense folded path

    x = jax.random.normal(key, (batch, seq, hidden), dtype=jnp.float32)

    # Deterministic params, matching nn.Parameter(torch.ones/zeros(features))
    a_2 = jnp.ones((hidden,), dtype=jnp.float32)
    b_2 = jnp.zeros((hidden,), dtype=jnp.float32)

    out = layer_norm(x, a_2, b_2, eps=1e-6)
    out = jax.block_until_ready(out)

    # Reference in plain JAX (unbiased std, eps added to the std — module semantics)
    mean = jnp.mean(x, axis=-1, keepdims=True)
    std = jnp.std(x, axis=-1, keepdims=True, ddof=1)
    ref = a_2 * (x - mean) / (std + 1e-6) + b_2
    assert jnp.allclose(out, ref, atol=1e-5, rtol=1e-5), "mismatch vs reference"

    print("KERNEL_OK")
</pallas_src>

<mosaic_0001>
module attributes {stable_mosaic.version = 11 : i64} {
  func.func @_layernorm_kernel_folded(%arg0: i32, %arg1: memref<8x128xf32, #tpu.memory_space<vmem>>, %arg2: memref<1x128xf32, #tpu.memory_space<vmem>>, %arg3: memref<1x128xf32, #tpu.memory_space<vmem>>, %arg4: memref<128x128xf32, #tpu.memory_space<vmem>>, %arg5: memref<8x128xf32, #tpu.memory_space<vmem>>) attributes {dimension_semantics = [#tpu.dimension_semantics<parallel>], iteration_bounds = array<i64: 1>, scalar_prefetch = 0 : i64, scratch_operands = 0 : i64, tpu.core_type = #tpu.core_type<tc>, window_params = [{transform_indices = @transform_0, window_bounds = array<i64: 8, 128>}, {pipeline_mode = #tpu.pipeline_mode<synchronous>, transform_indices = @transform_1, window_bounds = array<i64: 1, 128>}, {pipeline_mode = #tpu.pipeline_mode<synchronous>, transform_indices = @transform_2, window_bounds = array<i64: 1, 128>}, {pipeline_mode = #tpu.pipeline_mode<synchronous>, transform_indices = @transform_3, window_bounds = array<i64: 128, 128>}, {transform_indices = @transform_4, window_bounds = array<i64: 8, 128>}]} {
    %c0 = arith.constant 0 : index
    %c0_0 = arith.constant 0 : index
    %0 = vector.load %arg1[%c0, %c0_0] : memref<8x128xf32, #tpu.memory_space<vmem>>, vector<8x128xf32>
    %c0_1 = arith.constant 0 : index
    %c0_2 = arith.constant 0 : index
    %1 = vector.load %arg2[%c0_1, %c0_2] : memref<1x128xf32, #tpu.memory_space<vmem>>, vector<1x128xf32>
    %c0_3 = arith.constant 0 : index
    %c0_4 = arith.constant 0 : index
    %2 = vector.load %arg3[%c0_3, %c0_4] : memref<1x128xf32, #tpu.memory_space<vmem>>, vector<1x128xf32>
    %c0_5 = arith.constant 0 : index
    %c0_6 = arith.constant 0 : index
    %3 = vector.load %arg4[%c0_5, %c0_6] : memref<128x128xf32, #tpu.memory_space<vmem>>, vector<128x128xf32>
    %cst = arith.constant dense<0.000000e+00> : vector<8x128xf32>
    %4 = tpu.matmul %0, %3, %cst {dimension_numbers = #tpu.dot_dimension_numbers<[1], [0], [0], [1], [0, 0, 1, 1], [], []>, precision = #tpu.contract_precision<fp32>} : vector<8x128xf32>, vector<128x128xf32>, vector<8x128xf32> -> vector<8x128xf32>
    %5 = arith.mulf %0, %0 : vector<8x128xf32>
    %cst_7 = arith.constant dense<0.000000e+00> : vector<8x128xf32>
    %6 = tpu.matmul %5, %3, %cst_7 {dimension_numbers = #tpu.dot_dimension_numbers<[1], [0], [0], [1], [0, 0, 1, 1], [], []>, precision = #tpu.contract_precision<fp32>} : vector<8x128xf32>, vector<128x128xf32>, vector<8x128xf32> -> vector<8x128xf32>
    %cst_8 = arith.constant 3.125000e-02 : f32
    %7 = vector.broadcast %cst_8 : f32 to vector<8x128xf32>
    %8 = arith.mulf %4, %7 : vector<8x128xf32>
    %9 = arith.mulf %4, %8 : vector<8x128xf32>
    %10 = arith.subf %6, %9 : vector<8x128xf32>
    %cst_9 = arith.constant 0.0322580636 : f32
    %11 = vector.broadcast %cst_9 : f32 to vector<8x128xf32>
    %12 = arith.mulf %10, %11 : vector<8x128xf32>
    %cst_10 = arith.constant 0.000000e+00 : f32
    %13 = vector.broadcast %cst_10 : f32 to vector<8x128xf32>
    %14 = arith.maximumf %12, %13 : vector<8x128xf32>
    %15 = math.sqrt %14 : vector<8x128xf32>
    %cst_11 = arith.constant 9.99999997E-7 : f32
    %16 = vector.broadcast %cst_11 : f32 to vector<8x128xf32>
    %17 = arith.addf %15, %16 : vector<8x128xf32>
    %18 = tpu.reciprocal %17 : vector<8x128xf32> -> vector<8x128xf32>
    %19 = arith.subf %0, %8 : vector<8x128xf32>
    %20 = arith.mulf %19, %18 : vector<8x128xf32>
    %21 = vector.broadcast %1 : vector<1x128xf32> to vector<8x128xf32>
    %22 = arith.mulf %20, %21 : vector<8x128xf32>
    %23 = vector.broadcast %2 : vector<1x128xf32> to vector<8x128xf32>
    %24 = arith.addf %22, %23 : vector<8x128xf32>
    %c0_12 = arith.constant 0 : index
    %c0_13 = arith.constant 0 : index
    %25 = vector.load %arg5[%c0_12, %c0_13] : memref<8x128xf32, #tpu.memory_space<vmem>>, vector<8x128xf32>
    tpu.vector_store %arg5[%c0_12, %c0_13], %24 {strides = array<i32>} : memref<8x128xf32, #tpu.memory_space<vmem>>, vector<8x128xf32>,
    return
  }
  func.func @transform_0(%arg0: i32) -> (i32, i32) {
    %c0_i32 = arith.constant 0 : i32
    %c0_i32_0 = arith.constant 0 : i32
    return %arg0, %c0_i32 : i32, i32
  }
  func.func @transform_1(%arg0: i32) -> (i32, i32) {
    %c0_i32 = arith.constant 0 : i32
    %c0_i32_0 = arith.constant 0 : i32
    %c0_i32_1 = arith.constant 0 : i32
    return %c0_i32, %c0_i32_0 : i32, i32
  }
  func.func @transform_2(%arg0: i32) -> (i32, i32) {
    %c0_i32 = arith.constant 0 : i32
    %c0_i32_0 = arith.constant 0 : i32
    %c0_i32_1 = arith.constant 0 : i32
    return %c0_i32, %c0_i32_0 : i32, i32
  }
  func.func @transform_3(%arg0: i32) -> (i32, i32) {
    %c0_i32 = arith.constant 0 : i32
    %c0_i32_0 = arith.constant 0 : i32
    %c0_i32_1 = arith.constant 0 : i32
    return %c0_i32, %c0_i32_0 : i32, i32
  }
  func.func @transform_4(%arg0: i32) -> (i32, i32) {
    %c0_i32 = arith.constant 0 : i32
    %c0_i32_0 = arith.constant 0 : i32
    return %arg0, %c0_i32 : i32, i32
  }
}

</mosaic_0001>

<llo_original>
// kernel: tpu_custom_call.1
$region0: #{tpu_custom_call.1}
  #allocation0 [shape = 'u32[]', space=smem, size = 0x4, offset = 0x4, fixed_abs, tag = 'smem constant byte address 0x4 - core index']
  #allocation1 [shape = 'u32[144,128]{1,0:T(1,128)}', space=vmem, size = 0x12000, scoped, tag = 'internal scratch']
  %s0 = inlined_call_operand.hbm [shape: f32[8,128], index: 0, kind: input, shape index: {}]
  %s1 = inlined_call_operand.vmem [shape: f32[1,128], index: 1, kind: input, shape index: {}]
  %s2 = inlined_call_operand.vmem [shape: f32[1,128], index: 2, kind: input, shape index: {}]
  %s3 = inlined_call_operand.hbm [shape: f32[128,128], index: 3, kind: input, shape index: {}]
  %s4 = inlined_call_operand.hbm [shape: f32[8,128], index: 4, kind: output, shape index: {}]
  %s5 = sld [smem:[#allocation0]]
  $region34: #{tpu_custom_call.1} parent=0
    _
  %s7 = ssub.s32 1, %s5
  %s8 = scalar_select 0, %s7, %s5
  $region1: #{tpu_custom_call.1} parent=0
    #allocation2 [shape = 'u8[4096]{0}', space=vmem, size = 0x1000, scoped, tag = 'input window, operand 0, single buffered']
    #allocation3 [shape = 's32[1]{0}', space=sflag, size = 0x4, scoped, tag = 'scoped memory for tpu_custom_call.1']
    #allocation4 [shape = 's32[1]{0}', space=sflag, size = 0x4, scoped, tag = 'scoped memory for tpu_custom_call.1']
    #allocation5 [shape = 'u8[65536]{0}', space=vmem, size = 0x10000, scoped, tag = 'input window, operand 3, single buffered']
    #allocation6 [shape = 's32[1]{0}', space=sflag, size = 0x4, scoped, tag = 'scoped memory for tpu_custom_call.1']
    #allocation7 [shape = 'u8[4096]{0}', space=vmem, size = 0x1000, scoped, tag = 'output window, operand 0, single buffered']
    %9 = vsyncpa [#allocation3], 0
    %10 = vsyncpa [#allocation6], 0
    %11 = vsyncpa [#allocation4], 0
    // Predicated region
    $region2: #{tpu_custom_call.1} parent=1 // pred_check
      _
    $region3: #{tpu_custom_call.1} parent=1 // pred_check_branch
      %13 = sbr.rel (0) target = $region5
    $region4: #{tpu_custom_call.1} parent=1 // pred_region
      %s15 = ssub.s32 128, 128
      %16 = vsyncadd [#allocation3], %s15
      %s18 = sshll.u32 [#allocation2], 4
      %s19 = int_to_ptr.vmem [resolvable:$true] %s18
      %21 = dma.hbm_to_vmem [thread:$0]  %s0, 128, %s19, [#allocation3]
    $region5: #{tpu_custom_call.1} parent=1 // pred_fallthru
      _
    // Predicated region
    $region6: #{tpu_custom_call.1} parent=1 // pred_check
      _
    $region7: #{tpu_custom_call.1} parent=1 // pred_check_branch
      %23 = sbr.rel (0) target = $region9
    $region8: #{tpu_custom_call.1} parent=1 // pred_region
      _
    $region9: #{tpu_custom_call.1} parent=1 // pred_fallthru
      _
    // Predicated region
    $region10: #{tpu_custom_call.1} parent=1 // pred_check
      _
    $region11: #{tpu_custom_call.1} parent=1 // pred_check_branch
      %25 = sbr.rel (0) target = $region13
    $region12: #{tpu_custom_call.1} parent=1 // pred_region
      _
    $region13: #{tpu_custom_call.1} parent=1 // pred_fallthru
      _
    // Predicated region
    $region14: #{tpu_custom_call.1} parent=1 // pred_check
      _
    $region15: #{tpu_custom_call.1} parent=1 // pred_check_branch
      %27 = sbr.rel (0) target = $region17
    $region16: #{tpu_custom_call.1} parent=1 // pred_region
      %s29 = ssub.s32 2048, 2048
      %30 = vsyncadd [#allocation6], %s29
      %s31 = sshll.u32 [#allocation5], 4
      %s32 = int_to_ptr.vmem [resolvable:$true] %s31
      %37 = dma.hbm_to_vmem [thread:$0]  %s3, 2048, %s32, [#allocation6], 128, 128, 8
    $region17: #{tpu_custom_call.1} parent=1 // pred_fallthru
      _
    // Predicated region
    $region18: #{tpu_custom_call.1} parent=1 // pred_check
      _
    $region19: #{tpu_custom_call.1} parent=1 // pred_check_branch
      %39 = sbr.rel (0) target = $region21
    $region20: #{tpu_custom_call.1} parent=1 // pred_region
      %40 = dma.done [#allocation3], 128
    $region21: #{tpu_custom_call.1} parent=1 // pred_fallthru
      _
    // Predicated region
    $region22: #{tpu_custom_call.1} parent=1 // pred_check
      _
    $region23: #{tpu_custom_call.1} parent=1 // pred_check_branch
      %42 = sbr.rel (0) target = $region25
    $region24: #{tpu_custom_call.1} parent=1 // pred_region
      %43 = dma.done [#allocation6], 2048
    $region25: #{tpu_custom_call.1} parent=1 // pred_fallthru
      _
    %v44 = vld [vmem:[#allocation2] sm:$0xff]
    %v45 = vld [vmem:[%s1] sm:$0x1]
    %v46 = vld [vmem:[%s2] sm:$0x1]
    %v47 = vld [vmem:[#allocation5] sm:$0xff]
    %v48 = vld [vmem:[#allocation5 + $0x8] sm:$0xff]
    %v49 = vld [vmem:[#allocation5 + $0x10] sm:$0xff]
    %v50 = vld [vmem:[#allocation5 + $0x18] sm:$0xff]
    %v51 = vld [vmem:[#allocation5 + $0x20] sm:$0xff]
    %v52 = vld [vmem:[#allocation5 + $0x28] sm:$0xff]
    %v53 = vld [vmem:[#allocation5 + $0x30] sm:$0xff]
    %v54 = vld [vmem:[#allocation5 + $0x38] sm:$0xff]
    %v55 = vld [vmem:[#allocation5 + $0x40] sm:$0xff]
    %v56 = vld [vmem:[#allocation5 + $0x48] sm:$0xff]
    %v57 = vld [vmem:[#allocation5 + $0x50] sm:$0xff]
    %v58 = vld [vmem:[#allocation5 + $0x58] sm:$0xff]
    %v59 = vld [vmem:[#allocation5 + $0x60] sm:$0xff]
    %v60 = vld [vmem:[#allocation5 + $0x68] sm:$0xff]
    %v61 = vld [vmem:[#allocation5 + $0x70] sm:$0xff]
    %v62 = vld [vmem:[#allocation5 + $0x78] sm:$0xff]
    %63 = vmatprep.subr.mxu0 0.0
    %v64 = vand.u32 %v62, 4294901760
    %65 = vmatpush1.msra.mxu0 %v64
    %66 = vmatprep.subr.mxu0 0.0
    %v67 = vand.u32 %v61, 4294901760
    %68 = vmatpush1.msra.mxu0 %v67
    %69 = vmatprep.subr.mxu0 0.0
    %v70 = vand.u32 %v60, 4294901760
    %71 = vmatpush1.msra.mxu0 %v70
    %72 = vmatprep.subr.mxu0 0.0
    %v73 = vand.u32 %v59, 4294901760
    %74 = vmatpush1.msra.mxu0 %v73
    %75 = vmatprep.subr.mxu0 0.0
    %v76 = vand.u32 %v58, 4294901760
    %77 = vmatpush1.msra.mxu0 %v76
    %78 = vmatprep.subr.mxu0 0.0
    %v79 = vand.u32 %v57, 4294901760
    %80 = vmatpush1.msra.mxu0 %v79
    %81 = vmatprep.subr.mxu0 0.0
    %v82 = vand.u32 %v56, 4294901760
    %83 = vmatpush1.msra.mxu0 %v82
    %84 = vmatprep.subr.mxu0 0.0
    %v85 = vand.u32 %v55, 4294901760
    %86 = vmatpush1.msra.mxu0 %v85
    %87 = vmatprep.subr.mxu0 0.0
    %v88 = vand.u32 %v54, 4294901760
    %89 = vmatpush1.msra.mxu0 %v88
    %90 = vmatprep.subr.mxu0 0.0
    %v91 = vand.u32 %v53, 4294901760
    %92 = vmatpush1.msra.mxu0 %v91
    %93 = vmatprep.subr.mxu0 0.0
    %v94 = vand.u32 %v52, 4294901760
    %95 = vmatpush1.msra.mxu0 %v94
    %96 = vmatprep.subr.mxu0 0.0
    %v97 = vand.u32 %v51, 4294901760
    %98 = vmatpush1.msra.mxu0 %v97
    %99 = vmatprep.subr.mxu0 0.0
    %v100 = vand.u32 %v50, 4294901760
    %101 = vmatpush1.msra.mxu0 %v100
    %102 = vmatprep.subr.mxu0 0.0
    %v103 = vand.u32 %v49, 4294901760
    %104 = vmatpush1.msra.mxu0 %v103
    %105 = vmatprep.subr.mxu0 0.0
    %v106 = vand.u32 %v48, 4294901760
    %107 = vmatpush1.msra.mxu0 %v106
    %108 = vmatprep.subr.mxu0 0.0
    %v109 = vand.u32 %v47, 4294901760
    %110 = vmatpush1.msra.mxu0 %v109
    %111 = vmatprep.subr.mxu0 0.0
    %112 = vmatpush2.msra.mxu0 0.0
    %113 = vmatprep.subr.mxu0 0.0
    %114 = vmatpush2.msra.mxu0 0.0
    %115 = vmatprep.subr.mxu0 0.0
    %116 = vmatpush2.msra.mxu0 0.0
    %117 = vmatprep.subr.mxu0 0.0
    %118 = vmatpush2.msra.mxu0 0.0
    %119 = vmatprep.subr.mxu0 0.0
    %120 = vmatpush2.msra.mxu0 0.0
    %121 = vmatprep.subr.mxu0 0.0
    %122 = vmatpush2.msra.mxu0 0.0
    %123 = vmatprep.subr.mxu0 0.0
    %124 = vmatpush2.msra.mxu0 0.0
    %125 = vmatprep.subr.mxu0 0.0
    %126 = vmatpush2.msra.mxu0 0.0
    %127 = vmatprep.subr.mxu0 0.0
    %128 = vmatpush2.msra.mxu0 0.0
    %129 = vmatprep.subr.mxu0 0.0
    %130 = vmatpush2.msra.mxu0 0.0
    %131 = vmatprep.subr.mxu0 0.0
    %132 = vmatpush2.msra.mxu0 0.0
    %133 = vmatprep.subr.mxu0 0.0
    %134 = vmatpush2.msra.mxu0 0.0
    %135 = vmatprep.subr.mxu0 0.0
    %136 = vmatpush2.msra.mxu0 0.0
    %137 = vmatprep.subr.mxu0 0.0
    %138 = vmatpush2.msra.mxu0 0.0
    %139 = vmatprep.subr.mxu0 0.0
    %140 = vmatpush2.msra.mxu0 0.0
    %141 = vmatprep.subr.mxu0 0.0
    %142 = vmatpush2.msra.mxu0 0.0
    %143 = vmatprep.mubr.f32.mxu0 0.0
    %v144 = vand.u32 %v44, 4294901760
    %v145 = vsub.f32 %v44, %v144
    %v146 = vand.u32 %v145, 4294901760
    %v147 = vsub.f32 %v145, %v146
    %v148 = vand.u32 %v147, 4294901760
    %149 = vmatmul.mubr.f32.gmra.mxu0 %v148
    %v150 = vpop.f32.mrf.mxu0
    %v151 = vadd.f32 0.0, %v150
    %v152 = vpop.f32.mrf.mxu0
    %153 = vdwg.mxu0
    %154 = vmatprep.subr.mxu0 0.0
    %v155 = vand.u32 %v62, 4294901760
    %v156 = vsub.f32 %v62, %v155
    %v157 = vand.u32 %v156, 4294901760
    %v158 = vsub.f32 %v156, %v157
    %v159 = vand.u32 %v158, 4294901760
    %160 = vmatpush1.msra.mxu0 %v159
    %161 = vmatprep.subr.mxu0 0.0
    %v162 = vand.u32 %v61, 4294901760
    %v163 = vsub.f32 %v61, %v162
    %v164 = vand.u32 %v163, 4294901760
    %v165 = vsub.f32 %v163, %v164
    %v166 = vand.u32 %v165, 4294901760
    %167 = vmatpush1.msra.mxu0 %v166
    %168 = vmatprep.subr.mxu0 0.0
    %v169 = vand.u32 %v60, 4294901760
    %v170 = vsub.f32 %v60, %v169
    %v171 = vand.u32 %v170, 4294901760
    %v172 = vsub.f32 %v170, %v171
    %v173 = vand.u32 %v172, 4294901760
    %174 = vmatpush1.msra.mxu0 %v173
    %175 = vmatprep.subr.mxu0 0.0
    %v176 = vand.u32 %v59, 4294901760
    %v177 = vsub.f32 %v59, %v176
    %v178 = vand.u32 %v177, 4294901760
    %v179 = vsub.f32 %v177, %v178
    %v180 = vand.u32 %v179, 4294901760
    %181 = vmatpush1.msra.mxu0 %v180
    %182 = vmatprep.subr.mxu0 0.0
    %v183 = vand.u32 %v58, 4294901760
    %v184 = vsub.f32 %v58, %v183
    %v185 = vand.u32 %v184, 4294901760
    %v186 = vsub.f32 %v184, %v185
    %v187 = vand.u32 %v186, 4294901760
    %188 = vmatpush1.msra.mxu0 %v187
    %189 = vmatprep.subr.mxu0 0.0
    %v190 = vand.u32 %v57, 4294901760
    %v191 = vsub.f32 %v57, %v190
    %v192 = vand.u32 %v191, 4294901760
    %v193 = vsub.f32 %v191, %v192
    %v194 = vand.u32 %v193, 4294901760
    %195 = vmatpush1.msra.mxu0 %v194
    %196 = vmatprep.subr.mxu0 0.0
    %v197 = vand.u32 %v56, 4294901760
    %v198 = vsub.f32 %v56, %v197
    %v199 = vand.u32 %v198, 4294901760
    %v200 = vsub.f32 %v198, %v199
    %v201 = vand.u32 %v200, 4294901760
    %202 = vmatpush1.msra.mxu0 %v201
    %203 = vmatprep.subr.mxu0 0.0
    %v204 = vand.u32 %v55, 4294901760
    %v205 = vsub.f32 %v55, %v204
    %v206 = vand.u32 %v205, 4294901760
    %v207 = vsub.f32 %v205, %v206
    %v208 = vand.u32 %v207, 4294901760
    %209 = vmatpush1.msra.mxu0 %v208
    %210 = vmatprep.subr.mxu0 0.0
    %v211 = vand.u32 %v54, 4294901760
    %v212 = vsub.f32 %v54, %v211
    %v213 = vand.u32 %v212, 4294901760
    %v214 = vsub.f32 %v212, %v213
    %v215 = vand.u32 %v214, 4294901760
    %216 = vmatpush1.msra.mxu0 %v215
    %217 = vmatprep.subr.mxu0 0.0
    %v218 = vand.u32 %v53, 4294901760
    %v219 = vsub.f32 %v53, %v218
    %v220 = vand.u32 %v219, 4294901760
    %v221 = vsub.f32 %v219, %v220
    %v222 = vand.u32 %v221, 4294901760
    %223 = vmatpush1.msra.mxu0 %v222
    %224 = vmatprep.subr.mxu0 0.0
    %v225 = vand.u32 %v52, 4294901760
    %v226 = vsub.f32 %v52, %v225
    %v227 = vand.u32 %v226, 4294901760
    %v228 = vsub.f32 %v226, %v227
    %v229 = vand.u32 %v228, 4294901760
    %230 = vmatpush1.msra.mxu0 %v229
    %231 = vmatprep.subr.mxu0 0.0
    %v232 = vand.u32 %v51, 4294901760
    %v233 = vsub.f32 %v51, %v232
    %v234 = vand.u32 %v233, 4294901760
    %v235 = vsub.f32 %v233, %v234
    %v236 = vand.u32 %v235, 4294901760
    %237 = vmatpush1.msra.mxu0 %v236
    %238 = vmatprep.subr.mxu0 0.0
    %v239 = vand.u32 %v50, 4294901760
    %v240 = vsub.f32 %v50, %v239
    %v241 = vand.u32 %v240, 4294901760
    %v242 = vsub.f32 %v240, %v241
    %v243 = vand.u32 %v242, 4294901760
    %244 = vmatpush1.msra.mxu0 %v243
    %245 = vmatprep.subr.mxu0 0.0
    %v246 = vand.u32 %v49, 4294901760
    %v247 = vsub.f32 %v49, %v246
    %v248 = vand.u32 %v247, 4294901760
    %v249 = vsub.f32 %v247, %v248
    %v250 = vand.u32 %v249, 4294901760
    %251 = vmatpush1.msra.mxu0 %v250
    %252 = vmatprep.subr.mxu0 0.0
    %v253 = vand.u32 %v48, 4294901760
    %v254 = vsub.f32 %v48, %v253
    %v255 = vand.u32 %v254, 4294901760
    %v256 = vsub.f32 %v254, %v255
    %v257 = vand.u32 %v256, 4294901760
    %258 = vmatpush1.msra.mxu0 %v257
    %259 = vmatprep.subr.mxu0 0.0
    %v260 = vand.u32 %v47, 4294901760
    %v261 = vsub.f32 %v47, %v260
    %v262 = vand.u32 %v261, 4294901760
    %v263 = vsub.f32 %v261, %v262
    %v264 = vand.u32 %v263, 4294901760
    %265 = vmatpush1.msra.mxu0 %v264
    %266 = vmatprep.subr.mxu0 0.0
    %267 = vmatpush2.msra.mxu0 0.0
    %268 = vmatprep.subr.mxu0 0.0
    %269 = vmatpush2.msra.mxu0 0.0
    %270 = vmatprep.subr.mxu0 0.0
    %271 = vmatpush2.msra.mxu0 0.0
    %272 = vmatprep.subr.mxu0 0.0
    %273 = vmatpush2.msra.mxu0 0.0
    %274 = vmatprep.subr.mxu0 0.0
    %275 = vmatpush2.msra.mxu0 0.0
    %276 = vmatprep.subr.mxu0 0.0
    %277 = vmatpush2.msra.mxu0 0.0
    %278 = vmatprep.subr.mxu0 0.0
    %279 = vmatpush2.msra.mxu0 0.0
    %280 = vmatprep.subr.mxu0 0.0
    %281 = vmatpush2.msra.mxu0 0.0
    %282 = vmatprep.subr.mxu0 0.0
    %283 = vmatpush2.msra.mxu0 0.0
    %284 = vmatprep.subr.mxu0 0.0
    %285 = vmatpush2.msra.mxu0 0.0
    %286 = vmatprep.subr.mxu0 0.0
    %287 = vmatpush2.msra.mxu0 0.0
    %288 = vmatprep.subr.mxu0 0.0
    %289 = vmatpush2.msra.mxu0 0.0
    %290 = vmatprep.subr.mxu0 0.0
    %291 = vmatpush2.msra.mxu0 0.0
    %292 = vmatprep.subr.mxu0 0.0
    %293 = vmatpush2.msra.mxu0 0.0
    %294 = vmatprep.subr.mxu0 0.0
    %295 = vmatpush2.msra.mxu0 0.0
    %296 = vmatprep.subr.mxu0 0.0
    %297 = vmatpush2.msra.mxu0 0.0
    %298 = vmatprep.mubr.f32.mxu0 0.0
    %v299 = vand.u32 %v44, 4294901760
    %300 = vmatmul.mubr.f32.gmra.mxu0 %v299
    %v301 = vpop.f32.mrf.mxu0
    %v302 = vadd.f32 %v151, %v301
    %v303 = vpop.f32.mrf.mxu0
    %304 = vdwg.mxu0
    %305 = vmatprep.subr.mxu0 0.0
    %v306 = vand.u32 %v62, 4294901760
    %v307 = vsub.f32 %v62, %v306
    %308 = vmatpush1.msra.mxu0 %v307
    %309 = vmatprep.subr.mxu0 0.0
    %v310 = vand.u32 %v61, 4294901760
    %v311 = vsub.f32 %v61, %v310
    %312 = vmatpush1.msra.mxu0 %v311
    %313 = vmatprep.subr.mxu0 0.0
    %v314 = vand.u32 %v60, 4294901760
    %v315 = vsub.f32 %v60, %v314
    %316 = vmatpush1.msra.mxu0 %v315
    %317 = vmatprep.subr.mxu0 0.0
    %v318 = vand.u32 %v59, 4294901760
    %v319 = vsub.f32 %v59, %v318
    %320 = vmatpush1.msra.mxu0 %v319
    %321 = vmatprep.subr.mxu0 0.0
    %v322 = vand.u32 %v58, 4294901760
    %v323 = vsub.f32 %v58, %v322
    %324 = vmatpush1.msra.mxu0 %v323
    %325 = vmatprep.subr.mxu0 0.0
    %v326 = vand.u32 %v57, 4294901760
    %v327 = vsub.f32 %v57, %v326
    %328 = vmatpush1.msra.mxu0 %v327
    %329 = vmatprep.subr.mxu0 0.0
    %v330 = vand.u32 %v56, 4294901760
    %v331 = vsub.f32 %v56, %v330
    %332 = vmatpush1.msra.mxu0 %v331
    %333 = vmatprep.subr.mxu0 0.0
    %v334 = vand.u32 %v55, 4294901760
    %v335 = vsub.f32 %v55, %v334
    %336 = vmatpush1.msra.mxu0 %v335
    %337 = vmatprep.subr.mxu0 0.0
    %v338 = vand.u32 %v54, 4294901760
    %v339 = vsub.f32 %v54, %v338
    %340 = vmatpush1.msra.mxu0 %v339
    %341 = vmatprep.subr.mxu0 0.0
    %v342 = vand.u32 %v53, 4294901760
    %v343 = vsub.f32 %v53, %v342
    %344 = vmatpush1.msra.mxu0 %v343
    %345 = vmatprep.subr.mxu0 0.0
    %v346 = vand.u32 %v52, 4294901760
    %v347 = vsub.f32 %v52, %v346
    %348 = vmatpush1.msra.mxu0 %v347
    %349 = vmatprep.subr.mxu0 0.0
    %v350 = vand.u32 %v51, 4294901760
    %v351 = vsub.f32 %v51, %v350
    %352 = vmatpush1.msra.mxu0 %v351
    %353 = vmatprep.subr.mxu0 0.0
    %v354 = vand.u32 %v50, 4294901760
    %v355 = vsub.f32 %v50, %v354
    %356 = vmatpush1.msra.mxu0 %v355
    %357 = vmatprep.subr.mxu0 0.0
    %v358 = vand.u32 %v49, 4294901760
    %v359 = vsub.f32 %v49, %v358
    %360 = vmatpush1.msra.mxu0 %v359
    %361 = vmatprep.subr.mxu0 0.0
    %v362 = vand.u32 %v48, 4294901760
    %v363 = vsub.f32 %v48, %v362
    %364 = vmatpush1.msra.mxu0 %v363
    %365 = vmatprep.subr.mxu0 0.0
    %v366 = vand.u32 %v47, 4294901760
    %v367 = vsub.f32 %v47, %v366
    %368 = vmatpush1.msra.mxu0 %v367
    %369 = vmatprep.subr.mxu0 0.0
    %370 = vmatpush2.msra.mxu0 0.0
    %371 = vmatprep.subr.mxu0 0.0
    %372 = vmatpush2.msra.mxu0 0.0
    %373 = vmatprep.subr.mxu0 0.0
    %374 = vmatpush2.msra.mxu0 0.0
    %375 = vmatprep.subr.mxu0 0.0
    %376 = vmatpush2.msra.mxu0 0.0
    %377 = vmatprep.subr.mxu0 0.0
    %378 = vmatpush2.msra.mxu0 0.0
    %379 = vmatprep.subr.mxu0 0.0
    %380 = vmatpush2.msra.mxu0 0.0
    %381 = vmatprep.subr.mxu0 0.0
    %382 = vmatpush2.msra.mxu0 0.0
    %383 = vmatprep.subr.mxu0 0.0
    %384 = vmatpush2.msra.mxu0 0.0
    %385 = vmatprep.subr.mxu0 0.0
    %386 = vmatpush2.msra.mxu0 0.0
    %387 = vmatprep.subr.mxu0 0.0
    %388 = vmatpush2.msra.mxu0 0.0
    %389 = vmatprep.subr.mxu0 0.0
    %390 = vmatpush2.msra.mxu0 0.0
    %391 = vmatprep.subr.mxu0 0.0
    %392 = vmatpush2.msra.mxu0 0.0
    %393 = vmatprep.subr.mxu0 0.0
    %394 = vmatpush2.msra.mxu0 0.0
    %395 = vmatprep.subr.mxu0 0.0
    %396 = vmatpush2.msra.mxu0 0.0
    %397 = vmatprep.subr.mxu0 0.0
    %398 = vmatpush2.msra.mxu0 0.0
    %399 = vmatprep.subr.mxu0 0.0
    %400 = vmatpush2.msra.mxu0 0.0
    %401 = vmatprep.mubr.f32.mxu0 0.0
    %v402 = vand.u32 %v44, 4294901760
    %v403 = vsub.f32 %v44, %v402
    %404 = vmatmul.mubr.f32.gmra.mxu0 %v403
    %v405 = vpop.f32.mrf.mxu0
    %v406 = vadd.f32 %v302, %v405
    %v407 = vpop.f32.mrf.mxu0
    %408 = vdwg.mxu0
    %409 = vmatprep.subr.mxu0 0.0
    %v410 = vand.u32 %v62, 4294901760
    %411 = vmatpush1.msra.mxu0 %v410
    %412 = vmatprep.subr.mxu0 0.0
    %v413 = vand.u32 %v61, 4294901760
    %414 = vmatpush1.msra.mxu0 %v413
    %415 = vmatprep.subr.mxu0 0.0
    %v416 = vand.u32 %v60, 4294901760
    %417 = vmatpush1.msra.mxu0 %v416
    %418 = vmatprep.subr.mxu0 0.0
    %v419 = vand.u32 %v59, 4294901760
    %420 = vmatpush1.msra.mxu0 %v419
    %421 = vmatprep.subr.mxu0 0.0
    %v422 = vand.u32 %v58, 4294901760
    %423 = vmatpush1.msra.mxu0 %v422
    %424 = vmatprep.subr.mxu0 0.0
    %v425 = vand.u32 %v57, 4294901760
    %426 = vmatpush1.msra.mxu0 %v425
    %427 = vmatprep.subr.mxu0 0.0
    %v428 = vand.u32 %v56, 4294901760
    %429 = vmatpush1.msra.mxu0 %v428
    %430 = vmatprep.subr.mxu0 0.0
    %v431 = vand.u32 %v55, 4294901760
    %432 = vmatpush1.msra.mxu0 %v431
    %433 = vmatprep.subr.mxu0 0.0
    %v434 = vand.u32 %v54, 4294901760
    %435 = vmatpush1.msra.mxu0 %v434
    %436 = vmatprep.subr.mxu0 0.0
    %v437 = vand.u32 %v53, 4294901760
    %438 = vmatpush1.msra.mxu0 %v437
    %439 = vmatprep.subr.mxu0 0.0
    %v440 = vand.u32 %v52, 4294901760
    %441 = vmatpush1.msra.mxu0 %v440
    %442 = vmatprep.subr.mxu0 0.0
    %v443 = vand.u32 %v51, 4294901760
    %444 = vmatpush1.msra.mxu0 %v443
    %445 = vmatprep.subr.mxu0 0.0
    %v446 = vand.u32 %v50, 4294901760
    %447 = vmatpush1.msra.mxu0 %v446
    %448 = vmatprep.subr.mxu0 0.0
    %v449 = vand.u32 %v49, 4294901760
    %450 = vmatpush1.msra.mxu0 %v449
    %451 = vmatprep.subr.mxu0 0.0
    %v452 = vand.u32 %v48, 4294901760
    %453 = vmatpush1.msra.mxu0 %v452
    %454 = vmatprep.subr.mxu0 0.0
    %v455 = vand.u32 %v47, 4294901760
    %456 = vmatpush1.msra.mxu0 %v455
    %457 = vmatprep.subr.mxu0 0.0
    %458 = vmatpush2.msra.mxu0 0.0
    %459 = vmatprep.subr.mxu0 0.0
    %460 = vmatpush2.msra.mxu0 0.0
    %461 = vmatprep.subr.mxu0 0.0
    %462 = vmatpush2.msra.mxu0 0.0
    %463 = vmatprep.subr.mxu0 0.0
    %464 = vmatpush2.msra.mxu0 0.0
    %465 = vmatprep.subr.mxu0 0.0
    %466 = vmatpush2.msra.mxu0 0.0
    %467 = vmatprep.subr.mxu0 0.0
    %468 = vmatpush2.msra.mxu0 0.0
    %469 = vmatprep.subr.mxu0 0.0
    %470 = vmatpush2.msra.mxu0 0.0
    %471 = vmatprep.subr.mxu0 0.0
    %472 = vmatpush2.msra.mxu0 0.0
    %473 = vmatprep.subr.mxu0 0.0
    %474 = vmatpush2.msra.mxu0 0.0
    %475 = vmatprep.subr.mxu0 0.0
    %476 = vmatpush2.msra.mxu0 0.0
    %477 = vmatprep.subr.mxu0 0.0
    %478 = vmatpush2.msra.mxu0 0.0
    %479 = vmatprep.subr.mxu0 0.0
    %480 = vmatpush2.msra.mxu0 0.0
    %481 = vmatprep.subr.mxu0 0.0
    %482 = vmatpush2.msra.mxu0 0.0
    %483 = vmatprep.subr.mxu0 0.0
    %484 = vmatpush2.msra.mxu0 0.0
    %485 = vmatprep.subr.mxu0 0.0
    %486 = vmatpush2.msra.mxu0 0.0
    %487 = vmatprep.subr.mxu0 0.0
    %488 = vmatpush2.msra.mxu0 0.0
    %489 = vmatprep.mubr.f32.mxu0 0.0
    %v490 = vand.u32 %v44, 4294901760
    %v491 = vsub.f32 %v44, %v490
    %v492 = vand.u32 %v491, 4294901760
    %493 = vmatmul.mubr.f32.gmra.mxu0 %v492
    %v494 = vpop.f32.mrf.mxu0
    %v495 = vadd.f32 %v406, %v494
    %v496 = vpop.f32.mrf.mxu0
    %497 = vdwg.mxu0
    %498 = vmatprep.subr.mxu0 0.0
    %v499 = vand.u32 %v62, 4294901760
    %v500 = vsub.f32 %v62, %v499
    %v501 = vand.u32 %v500, 4294901760
    %502 = vmatpush1.msra.mxu0 %v501
    %503 = vmatprep.subr.mxu0 0.0
    %v504 = vand.u32 %v61, 4294901760
    %v505 = vsub.f32 %v61, %v504
    %v506 = vand.u32 %v505, 4294901760
    %507 = vmatpush1.msra.mxu0 %v506
    %508 = vmatprep.subr.mxu0 0.0
    %v509 = vand.u32 %v60, 4294901760
    %v510 = vsub.f32 %v60, %v509
    %v511 = vand.u32 %v510, 4294901760
    %512 = vmatpush1.msra.mxu0 %v511
    %513 = vmatprep.subr.mxu0 0.0
    %v514 = vand.u32 %v59, 4294901760
    %v515 = vsub.f32 %v59, %v514
    %v516 = vand.u32 %v515, 4294901760
    %517 = vmatpush1.msra.mxu0 %v516
    %518 = vmatprep.subr.mxu0 0.0
    %v519 = vand.u32 %v58, 4294901760
    %v520 = vsub.f32 %v58, %v519
    %v521 = vand.u32 %v520, 4294901760
    %522 = vmatpush1.msra.mxu0 %v521
    %523 = vmatprep.subr.mxu0 0.0
    %v524 = vand.u32 %v57, 4294901760
    %v525 = vsub.f32 %v57, %v524
    %v526 = vand.u32 %v525, 4294901760
    %527 = vmatpush1.msra.mxu0 %v526
    %528 = vmatprep.subr.mxu0 0.0
    %v529 = vand.u32 %v56, 4294901760
    %v530 = vsub.f32 %v56, %v529
    %v531 = vand.u32 %v530, 4294901760
    %532 = vmatpush1.msra.mxu0 %v531
    %533 = vmatprep.subr.mxu0 0.0
    %v534 = vand.u32 %v55, 4294901760
    %v535 = vsub.f32 %v55, %v534
    %v536 = vand.u32 %v535, 4294901760
    %537 = vmatpush1.msra.mxu0 %v536
    %538 = vmatprep.subr.mxu0 0.0
    %v539 = vand.u32 %v54, 4294901760
    %v540 = vsub.f32 %v54, %v539
    %v541 = vand.u32 %v540, 4294901760
    %542 = vmatpush1.msra.mxu0 %v541
    %543 = vmatprep.subr.mxu0 0.0
    %v544 = vand.u32 %v53, 4294901760
    %v545 = vsub.f32 %v53, %v544
    %v546 = vand.u32 %v545, 4294901760
    %547 = vmatpush1.msra.mxu0 %v546
    %548 = vmatprep.subr.mxu0 0.0
    %v549 = vand.u32 %v52, 4294901760
    %v550 = vsub.f32 %v52, %v549
    %v551 = vand.u32 %v550, 4294901760
    %552 = vmatpush1.msra.mxu0 %v551
    %553 = vmatprep.subr.mxu0 0.0
    %v554 = vand.u32 %v51, 4294901760
    %v555 = vsub.f32 %v51, %v554
    %v556 = vand.u32 %v555, 4294901760
    %557 = vmatpush1.msra.mxu0 %v556
    %558 = vmatprep.subr.mxu0 0.0
    %v559 = vand.u32 %v50, 4294901760
    %v560 = vsub.f32 %v50, %v559
    %v561 = vand.u32 %v560, 4294901760
    %562 = vmatpush1.msra.mxu0 %v561
    %563 = vmatprep.subr.mxu0 0.0
    %v564 = vand.u32 %v49, 4294901760
    %v565 = vsub.f32 %v49, %v564
    %v566 = vand.u32 %v565, 4294901760
    %567 = vmatpush1.msra.mxu0 %v566
    %568 = vmatprep.subr.mxu0 0.0
    %v569 = vand.u32 %v48, 4294901760
    %v570 = vsub.f32 %v48, %v569
    %v571 = vand.u32 %v570, 4294901760
    %572 = vmatpush1.msra.mxu0 %v571
    %573 = vmatprep.subr.mxu0 0.0
    %v574 = vand.u32 %v47, 4294901760
    %v575 = vsub.f32 %v47, %v574
    %v576 = vand.u32 %v575, 4294901760
    %577 = vmatpush1.msra.mxu0 %v576
    %578 = vmatprep.subr.mxu0 0.0
    %579 = vmatpush2.msra.mxu0 0.0
    %580 = vmatprep.subr.mxu0 0.0
    %581 = vmatpush2.msra.mxu0 0.0
    %582 = vmatprep.subr.mxu0 0.0
    %583 = vmatpush2.msra.mxu0 0.0
    %584 = vmatprep.subr.mxu0 0.0
    %585 = vmatpush2.msra.mxu0 0.0
    %586 = vmatprep.subr.mxu0 0.0
    %587 = vmatpush2.msra.mxu0 0.0
    %588 = vmatprep.subr.mxu0 0.0
    %589 = vmatpush2.msra.mxu0 0.0
    %590 = vmatprep.subr.mxu0 0.0
    %591 = vmatpush2.msra.mxu0 0.0
    %592 = vmatprep.subr.mxu0 0.0
    %593 = vmatpush2.msra.mxu0 0.0
    %594 = vmatprep.subr.mxu0 0.0
    %595 = vmatpush2.msra.mxu0 0.0
    %596 = vmatprep.subr.mxu0 0.0
    %597 = vmatpush2.msra.mxu0 0.0
    %598 = vmatprep.subr.mxu0 0.0
    %599 = vmatpush2.msra.mxu0 0.0
    %600 = vmatprep.subr.mxu0 0.0
    %601 = vmatpush2.msra.mxu0 0.0
    %602 = vmatprep.subr.mxu0 0.0
    %603 = vmatpush2.msra.mxu0 0.0
    %604 = vmatprep.subr.mxu0 0.0
    %605 = vmatpush2.msra.mxu0 0.0
    %606 = vmatprep.subr.mxu0 0.0
    %607 = vmatpush2.msra.mxu0 0.0
    %608 = vmatprep.subr.mxu0 0.0
    %609 = vmatpush2.msra.mxu0 0.0
    %610 = vmatprep.mubr.f32.mxu0 0.0
    %v611 = vand.u32 %v44, 4294901760
    %612 = vmatmul.mubr.f32.gmra.mxu0 %v611
    %v613 = vpop.f32.mrf.mxu0
    %v614 = vadd.f32 %v495, %v613
    %v615 = vpop.f32.mrf.mxu0
    %616 = vdwg.mxu0
    %617 = vmatprep.subr.mxu0 0.0
    %v618 = vand.u32 %v62, 4294901760
    %619 = vmatpush1.msra.mxu0 %v618
    %620 = vmatprep.subr.mxu0 0.0
    %v621 = vand.u32 %v61, 4294901760
    %622 = vmatpush1.msra.mxu0 %v621
    %623 = vmatprep.subr.mxu0 0.0
    %v624 = vand.u32 %v60, 4294901760
    %625 = vmatpush1.msra.mxu0 %v624
    %626 = vmatprep.subr.mxu0 0.0
    %v627 = vand.u32 %v59, 4294901760
    %628 = vmatpush1.msra.mxu0 %v627
    %629 = vmatprep.subr.mxu0 0.0
    %v630 = vand.u32 %v58, 4294901760
    %631 = vmatpush1.msra.mxu0 %v630
    %632 = vmatprep.subr.mxu0 0.0
    %v633 = vand.u32 %v57, 4294901760
    %634 = vmatpush1.msra.mxu0 %v633
    %635 = vmatprep.subr.mxu0 0.0
    %v636 = vand.u32 %v56, 4294901760
    %637 = vmatpush1.msra.mxu0 %v636
    %638 = vmatprep.subr.mxu0 0.0
    %v639 = vand.u32 %v55, 4294901760
    %640 = vmatpush1.msra.mxu0 %v639
    %641 = vmatprep.subr.mxu0 0.0
    %v642 = vand.u32 %v54, 4294901760
    %643 = vmatpush1.msra.mxu0 %v642
    %644 = vmatprep.subr.mxu0 0.0
    %v645 = vand.u32 %v53, 4294901760
    %646 = vmatpush1.msra.mxu0 %v645
    %647 = vmatprep.subr.mxu0 0.0
    %v648 = vand.u32 %v52, 4294901760
    %649 = vmatpush1.msra.mxu0 %v648
    %650 = vmatprep.subr.mxu0 0.0
    %v651 = vand.u32 %v51, 4294901760
    %652 = vmatpush1.msra.mxu0 %v651
    %653 = vmatprep.subr.mxu0 0.0
    %v654 = vand.u32 %v50, 4294901760
    %655 = vmatpush1.msra.mxu0 %v654
    %656 = vmatprep.subr.mxu0 0.0
    %v657 = vand.u32 %v49, 4294901760
    %658 = vmatpush1.msra.mxu0 %v657
    %659 = vmatprep.subr.mxu0 0.0
    %v660 = vand.u32 %v48, 4294901760
    %661 = vmatpush1.msra.mxu0 %v660
    %662 = vmatprep.subr.mxu0 0.0
    %v663 = vand.u32 %v47, 4294901760
    %664 = vmatpush1.msra.mxu0 %v663
    %665 = vmatprep.subr.mxu0 0.0
    %666 = vmatpush2.msra.mxu0 0.0
    %667 = vmatprep.subr.mxu0 0.0
    %668 = vmatpush2.msra.mxu0 0.0
    %669 = vmatprep.subr.mxu0 0.0
    %670 = vmatpush2.msra.mxu0 0.0
    %671 = vmatprep.subr.mxu0 0.0
    %672 = vmatpush2.msra.mxu0 0.0
    %673 = vmatprep.subr.mxu0 0.0
    %674 = vmatpush2.msra.mxu0 0.0
    %675 = vmatprep.subr.mxu0 0.0
    %676 = vmatpush2.msra.mxu0 0.0
    %677 = vmatprep.subr.mxu0 0.0
    %678 = vmatpush2.msra.mxu0 0.0
    %679 = vmatprep.subr.mxu0 0.0
    %680 = vmatpush2.msra.mxu0 0.0
    %681 = vmatprep.subr.mxu0 0.0
    %682 = vmatpush2.msra.mxu0 0.0
    %683 = vmatprep.subr.mxu0 0.0
    %684 = vmatpush2.msra.mxu0 0.0
    %685 = vmatprep.subr.mxu0 0.0
    %686 = vmatpush2.msra.mxu0 0.0
    %687 = vmatprep.subr.mxu0 0.0
    %688 = vmatpush2.msra.mxu0 0.0
    %689 = vmatprep.subr.mxu0 0.0
    %690 = vmatpush2.msra.mxu0 0.0
    %691 = vmatprep.subr.mxu0 0.0
    %692 = vmatpush2.msra.mxu0 0.0
    %693 = vmatprep.subr.mxu0 0.0
    %694 = vmatpush2.msra.mxu0 0.0
    %695 = vmatprep.subr.mxu0 0.0
    %696 = vmatpush2.msra.mxu0 0.0
    %697 = vmatprep.mubr.f32.mxu0 0.0
    %v698 = vand.u32 %v44, 4294901760
    %699 = vmatmul.mubr.f32.gmra.mxu0 %v698
    %v700 = vpop.f32.mrf.mxu0
    %v701 = vadd.f32 %v614, %v700
    %v702 = vpop.f32.mrf.mxu0
    %703 = vdwg.mxu0
    %v704 = vmul.f32 %v44, %v44
    %705 = vmatprep.subr.mxu0 0.0
    %v706 = vand.u32 %v62, 4294901760
    %707 = vmatpush1.msra.mxu0 %v706
    %708 = vmatprep.subr.mxu0 0.0
    %v709 = vand.u32 %v61, 4294901760
    %710 = vmatpush1.msra.mxu0 %v709
    %711 = vmatprep.subr.mxu0 0.0
    %v712 = vand.u32 %v60, 4294901760
    %713 = vmatpush1.msra.mxu0 %v712
    %714 = vmatprep.subr.mxu0 0.0
    %v715 = vand.u32 %v59, 4294901760
    %716 = vmatpush1.msra.mxu0 %v715
    %717 = vmatprep.subr.mxu0 0.0
    %v718 = vand.u32 %v58, 4294901760
    %719 = vmatpush1.msra.mxu0 %v718
    %720 = vmatprep.subr.mxu0 0.0
    %v721 = vand.u32 %v57, 4294901760
    %722 = vmatpush1.msra.mxu0 %v721
    %723 = vmatprep.subr.mxu0 0.0
    %v724 = vand.u32 %v56, 4294901760
    %725 = vmatpush1.msra.mxu0 %v724
    %726 = vmatprep.subr.mxu0 0.0
    %v727 = vand.u32 %v55, 4294901760
    %728 = vmatpush1.msra.mxu0 %v727
    %729 = vmatprep.subr.mxu0 0.0
    %v730 = vand.u32 %v54, 4294901760
    %731 = vmatpush1.msra.mxu0 %v730
    %732 = vmatprep.subr.mxu0 0.0
    %v733 = vand.u32 %v53, 4294901760
    %734 = vmatpush1.msra.mxu0 %v733
    %735 = vmatprep.subr.mxu0 0.0
    %v736 = vand.u32 %v52, 4294901760
    %737 = vmatpush1.msra.mxu0 %v736
    %738 = vmatprep.subr.mxu0 0.0
    %v739 = vand.u32 %v51, 4294901760
    %740 = vmatpush1.msra.mxu0 %v739
    %741 = vmatprep.subr.mxu0 0.0
    %v742 = vand.u32 %v50, 4294901760
    %743 = vmatpush1.msra.mxu0 %v742
    %744 = vmatprep.subr.mxu0 0.0
    %v745 = vand.u32 %v49, 4294901760
    %746 = vmatpush1.msra.mxu0 %v745
    %747 = vmatprep.subr.mxu0 0.0
    %v748 = vand.u32 %v48, 4294901760
    %749 = vmatpush1.msra.mxu0 %v748
    %750 = vmatprep.subr.mxu0 0.0
    %v751 = vand.u32 %v47, 4294901760
    %752 = vmatpush1.msra.mxu0 %v751
    %753 = vmatprep.subr.mxu0 0.0
    %754 = vmatpush2.msra.mxu0 0.0
    %755 = vmatprep.subr.mxu0 0.0
    %756 = vmatpush2.msra.mxu0 0.0
    %757 = vmatprep.subr.mxu0 0.0
    %758 = vmatpush2.msra.mxu0 0.0
    %759 = vmatprep.subr.mxu0 0.0
    %760 = vmatpush2.msra.mxu0 0.0
    %761 = vmatprep.subr.mxu0 0.0
    %762 = vmatpush2.msra.mxu0 0.0
    %763 = vmatprep.subr.mxu0 0.0
    %764 = vmatpush2.msra.mxu0 0.0
    %765 = vmatprep.subr.mxu0 0.0
    %766 = vmatpush2.msra.mxu0 0.0
    %767 = vmatprep.subr.mxu0 0.0
    %768 = vmatpush2.msra.mxu0 0.0
    %769 = vmatprep.subr.mxu0 0.0
    %770 = vmatpush2.msra.mxu0 0.0
    %771 = vmatprep.subr.mxu0 0.0
    %772 = vmatpush2.msra.mxu0 0.0
    %773 = vmatprep.subr.mxu0 0.0
    %774 = vmatpush2.msra.mxu0 0.0
    %775 = vmatprep.subr.mxu0 0.0
    %776 = vmatpush2.msra.mxu0 0.0
    %777 = vmatprep.subr.mxu0 0.0
    %778 = vmatpush2.msra.mxu0 0.0
    %779 = vmatprep.subr.mxu0 0.0
    %780 = vmatpush2.msra.mxu0 0.0
    %781 = vmatprep.subr.mxu0 0.0
    %782 = vmatpush2.msra.mxu0 0.0
    %783 = vmatprep.subr.mxu0 0.0
    %784 = vmatpush2.msra.mxu0 0.0
    %785 = vmatprep.mubr.f32.mxu0 0.0
    %v786 = vand.u32 %v704, 4294901760
    %v787 = vsub.f32 %v704, %v786
    %v788 = vand.u32 %v787, 4294901760
    %v789 = vsub.f32 %v787, %v788
    %v790 = vand.u32 %v789, 4294901760
    %791 = vmatmul.mubr.f32.gmra.mxu0 %v790
    %v792 = vpop.f32.mrf.mxu0
    %v793 = vadd.f32 0.0, %v792
    %v794 = vpop.f32.mrf.mxu0
    %795 = vdwg.mxu0
    %796 = vmatprep.subr.mxu0 0.0
    %v797 = vand.u32 %v62, 4294901760
    %v798 = vsub.f32 %v62, %v797
    %v799 = vand.u32 %v798, 4294901760
    %v800 = vsub.f32 %v798, %v799
    %v801 = vand.u32 %v800, 4294901760
    %802 = vmatpush1.msra.mxu0 %v801
    %803 = vmatprep.subr.mxu0 0.0
    %v804 = vand.u32 %v61, 4294901760
    %v805 = vsub.f32 %v61, %v804
    %v806 = vand.u32 %v805, 4294901760
    %v807 = vsub.f32 %v805, %v806
    %v808 = vand.u32 %v807, 4294901760
    %809 = vmatpush1.msra.mxu0 %v808
    %810 = vmatprep.subr.mxu0 0.0
    %v811 = vand.u32 %v60, 4294901760
    %v812 = vsub.f32 %v60, %v811
    %v813 = vand.u32 %v812, 4294901760
    %v814 = vsub.f32 %v812, %v813
    %v815 = vand.u32 %v814, 4294901760
    %816 = vmatpush1.msra.mxu0 %v815
    %817 = vmatprep.subr.mxu0 0.0
    %v818 = vand.u32 %v59, 4294901760
    %v819 = vsub.f32 %v59, %v818
    %v820 = vand.u32 %v819, 4294901760
    %v821 = vsub.f32 %v819, %v820
    %v822 = vand.u32 %v821, 4294901760
    %823 = vmatpush1.msra.mxu0 %v822
    %824 = vmatprep.subr.mxu0 0.0
    %v825 = vand.u32 %v58, 4294901760
    %v826 = vsub.f32 %v58, %v825
    %v827 = vand.u32 %v826, 4294901760
    %v828 = vsub.f32 %v826, %v827
    %v829 = vand.u32 %v828, 4294901760
    %830 = vmatpush1.msra.mxu0 %v829
    %831 = vmatprep.subr.mxu0 0.0
    %v832 = vand.u32 %v57, 4294901760
    %v833 = vsub.f32 %v57, %v832
    %v834 = vand.u32 %v833, 4294901760
    %v835 = vsub.f32 %v833, %v834
    %v836 = vand.u32 %v835, 4294901760
    %837 = vmatpush1.msra.mxu0 %v836
    %838 = vmatprep.subr.mxu0 0.0
    %v839 = vand.u32 %v56, 4294901760
    %v840 = vsub.f32 %v56, %v839
    %v841 = vand.u32 %v840, 4294901760
    %v842 = vsub.f32 %v840, %v841
    %v843 = vand.u32 %v842, 4294901760
    %844 = vmatpush1.msra.mxu0 %v843
    %845 = vmatprep.subr.mxu0 0.0
    %v846 = vand.u32 %v55, 4294901760
    %v847 = vsub.f32 %v55, %v846
    %v848 = vand.u32 %v847, 4294901760
    %v849 = vsub.f32 %v847, %v848
    %v850 = vand.u32 %v849, 4294901760
    %851 = vmatpush1.msra.mxu0 %v850
    %852 = vmatprep.subr.mxu0 0.0
    %v853 = vand.u32 %v54, 4294901760
    %v854 = vsub.f32 %v54, %v853
    %v855 = vand.u32 %v854, 4294901760
    %v856 = vsub.f32 %v854, %v855
    %v857 = vand.u32 %v856, 4294901760
    %858 = vmatpush1.msra.mxu0 %v857
    %859 = vmatprep.subr.mxu0 0.0
    %v860 = vand.u32 %v53, 4294901760
    %v861 = vsub.f32 %v53, %v860
    %v862 = vand.u32 %v861, 4294901760
    %v863 = vsub.f32 %v861, %v862
    %v864 = vand.u32 %v863, 4294901760
    %865 = vmatpush1.msra.mxu0 %v864
    %866 = vmatprep.subr.mxu0 0.0
    %v867 = vand.u32 %v52, 4294901760
    %v868 = vsub.f32 %v52, %v867
    %v869 = vand.u32 %v868, 4294901760
    %v870 = vsub.f32 %v868, %v869
    %v871 = vand.u32 %v870, 4294901760
    %872 = vmatpush1.msra.mxu0 %v871
    %873 = vmatprep.subr.mxu0 0.0
    %v874 = vand.u32 %v51, 4294901760
    %v875 = vsub.f32 %v51, %v874
    %v876 = vand.u32 %v875, 4294901760
    %v877 = vsub.f32 %v875, %v876
    %v878 = vand.u32 %v877, 4294901760
    %879 = vmatpush1.msra.mxu0 %v878
    %880 = vmatprep.subr.mxu0 0.0
    %v881 = vand.u32 %v50, 4294901760
    %v882 = vsub.f32 %v50, %v881
    %v883 = vand.u32 %v882, 4294901760
    %v884 = vsub.f32 %v882, %v883
    %v885 = vand.u32 %v884, 4294901760
    %886 = vmatpush1.msra.mxu0 %v885
    %887 = vmatprep.subr.mxu0 0.0
    %v888 = vand.u32 %v49, 4294901760
    %v889 = vsub.f32 %v49, %v888
    %v890 = vand.u32 %v889, 4294901760
    %v891 = vsub.f32 %v889, %v890
    %v892 = vand.u32 %v891, 4294901760
    %893 = vmatpush1.msra.mxu0 %v892
    %894 = vmatprep.subr.mxu0 0.0
    %v895 = vand.u32 %v48, 4294901760
    %v896 = vsub.f32 %v48, %v895
    %v897 = vand.u32 %v896, 4294901760
    %v898 = vsub.f32 %v896, %v897
    %v899 = vand.u32 %v898, 4294901760
    %900 = vmatpush1.msra.mxu0 %v899
    %901 = vmatprep.subr.mxu0 0.0
    %v902 = vand.u32 %v47, 4294901760
    %v903 = vsub.f32 %v47, %v902
    %v904 = vand.u32 %v903, 4294901760
    %v905 = vsub.f32 %v903, %v904
    %v906 = vand.u32 %v905, 4294901760
    %907 = vmatpush1.msra.mxu0 %v906
    %908 = vmatprep.subr.mxu0 0.0
    %909 = vmatpush2.msra.mxu0 0.0
    %910 = vmatprep.subr.mxu0 0.0
    %911 = vmatpush2.msra.mxu0 0.0
    %912 = vmatprep.subr.mxu0 0.0
    %913 = vmatpush2.msra.mxu0 0.0
    %914 = vmatprep.subr.mxu0 0.0
    %915 = vmatpush2.msra.mxu0 0.0
    %916 = vmatprep.subr.mxu0 0.0
    %917 = vmatpush2.msra.mxu0 0.0
    %918 = vmatprep.subr.mxu0 0.0
    %919 = vmatpush2.msra.mxu0 0.0
    %920 = vmatprep.subr.mxu0 0.0
    %921 = vmatpush2.msra.mxu0 0.0
    %922 = vmatprep.subr.mxu0 0.0
    %923 = vmatpush2.msra.mxu0 0.0
    %924 = vmatprep.subr.mxu0 0.0
    %925 = vmatpush2.msra.mxu0 0.0
    %926 = vmatprep.subr.mxu0 0.0
    %927 = vmatpush2.msra.mxu0 0.0
    %928 = vmatprep.subr.mxu0 0.0
    %929 = vmatpush2.msra.mxu0 0.0
    %930 = vmatprep.subr.mxu0 0.0
    %931 = vmatpush2.msra.mxu0 0.0
    %932 = vmatprep.subr.mxu0 0.0
    %933 = vmatpush2.msra.mxu0 0.0
    %934 = vmatprep.subr.mxu0 0.0
    %935 = vmatpush2.msra.mxu0 0.0
    %936 = vmatprep.subr.mxu0 0.0
    %937 = vmatpush2.msra.mxu0 0.0
    %938 = vmatprep.subr.mxu0 0.0
    %939 = vmatpush2.msra.mxu0 0.0
    %940 = vmatprep.mubr.f32.mxu0 0.0
    %v941 = vand.u32 %v704, 4294901760
    %942 = vmatmul.mubr.f32.gmra.mxu0 %v941
    %v943 = vpop.f32.mrf.mxu0
    %v944 = vadd.f32 %v793, %v943
    %v945 = vpop.f32.mrf.mxu0
    %946 = vdwg.mxu0
    %947 = vmatprep.subr.mxu0 0.0
    %v948 = vand.u32 %v62, 4294901760
    %v949 = vsub.f32 %v62, %v948
    %950 = vmatpush1.msra.mxu0 %v949
    %951 = vmatprep.subr.mxu0 0.0
    %v952 = vand.u32 %v61, 4294901760
    %v953 = vsub.f32 %v61, %v952
    %954 = vmatpush1.msra.mxu0 %v953
    %955 = vmatprep.subr.mxu0 0.0
    %v956 = vand.u32 %v60, 4294901760
    %v957 = vsub.f32 %v60, %v956
    %958 = vmatpush1.msra.mxu0 %v957
    %959 = vmatprep.subr.mxu0 0.0
    %v960 = vand.u32 %v59, 4294901760
    %v961 = vsub.f32 %v59, %v960
    %962 = vmatpush1.msra.mxu0 %v961
    %963 = vmatprep.subr.mxu0 0.0
    %v964 = vand.u32 %v58, 4294901760
    %v965 = vsub.f32 %v58, %v964
    %966 = vmatpush1.msra.mxu0 %v965
    %967 = vmatprep.subr.mxu0 0.0
    %v968 = vand.u32 %v57, 4294901760
    %v969 = vsub.f32 %v57, %v968
    %970 = vmatpush1.msra.mxu0 %v969
    %971 = vmatprep.subr.mxu0 0.0
    %v972 = vand.u32 %v56, 4294901760
    %v973 = vsub.f32 %v56, %v972
    %974 = vmatpush1.msra.mxu0 %v973
    %975 = vmatprep.subr.mxu0 0.0
    %v976 = vand.u32 %v55, 4294901760
    %v977 = vsub.f32 %v55, %v976
    %978 = vmatpush1.msra.mxu0 %v977
    %979 = vmatprep.subr.mxu0 0.0
    %v980 = vand.u32 %v54, 4294901760
    %v981 = vsub.f32 %v54, %v980
    %982 = vmatpush1.msra.mxu0 %v981
    %983 = vmatprep.subr.mxu0 0.0
    %v984 = vand.u32 %v53, 4294901760
    %v985 = vsub.f32 %v53, %v984
    %986 = vmatpush1.msra.mxu0 %v985
    %987 = vmatprep.subr.mxu0 0.0
    %v988 = vand.u32 %v52, 4294901760
    %v989 = vsub.f32 %v52, %v988
    %990 = vmatpush1.msra.mxu0 %v989
    %991 = vmatprep.subr.mxu0 0.0
    %v992 = vand.u32 %v51, 4294901760
    %v993 = vsub.f32 %v51, %v992
    %994 = vmatpush1.msra.mxu0 %v993
    %995 = vmatprep.subr.mxu0 0.0
    %v996 = vand.u32 %v50, 4294901760
    %v997 = vsub.f32 %v50, %v996
    %998 = vmatpush1.msra.mxu0 %v997
    %999 = vmatprep.subr.mxu0 0.0
    %v1000 = vand.u32 %v49, 4294901760
    %v1001 = vsub.f32 %v49, %v1000
    %1002 = vmatpush1.msra.mxu0 %v1001
    %1003 = vmatprep.subr.mxu0 0.0
    %v1004 = vand.u32 %v48, 4294901760
    %v1005 = vsub.f32 %v48, %v1004
    %1006 = vmatpush1.msra.mxu0 %v1005
    %1007 = vmatprep.subr.mxu0 0.0
    %v1008 = vand.u32 %v47, 4294901760
    %v1009 = vsub.f32 %v47, %v1008
    %1010 = vmatpush1.msra.mxu0 %v1009
    %1011 = vmatprep.subr.mxu0 0.0
    %1012 = vmatpush2.msra.mxu0 0.0
    %1013 = vmatprep.subr.mxu0 0.0
    %1014 = vmatpush2.msra.mxu0 0.0
    %1015 = vmatprep.subr.mxu0 0.0
    %1016 = vmatpush2.msra.mxu0 0.0
    %1017 = vmatprep.subr.mxu0 0.0
    %1018 = vmatpush2.msra.mxu0 0.0
    %1019 = vmatprep.subr.mxu0 0.0
    %1020 = vmatpush2.msra.mxu0 0.0
    %1021 = vmatprep.subr.mxu0 0.0
    %1022 = vmatpush2.msra.mxu0 0.0
    %1023 = vmatprep.subr.mxu0 0.0
    %1024 = vmatpush2.msra.mxu0 0.0
    %1025 = vmatprep.subr.mxu0 0.0
    %1026 = vmatpush2.msra.mxu0 0.0
    %1027 = vmatprep.subr.mxu0 0.0
    %1028 = vmatpush2.msra.mxu0 0.0
    %1029 = vmatprep.subr.mxu0 0.0
    %1030 = vmatpush2.msra.mxu0 0.0
    %1031 = vmatprep.subr.mxu0 0.0
    %1032 = vmatpush2.msra.mxu0 0.0
    %1033 = vmatprep.subr.mxu0 0.0
    %1034 = vmatpush2.msra.mxu0 0.0
    %1035 = vmatprep.subr.mxu0 0.0
    %1036 = vmatpush2.msra.mxu0 0.0
    %1037 = vmatprep.subr.mxu0 0.0
    %1038 = vmatpush2.msra.mxu0 0.0
    %1039 = vmatprep.subr.mxu0 0.0
    %1040 = vmatpush2.msra.mxu0 0.0
    %1041 = vmatprep.subr.mxu0 0.0
    %1042 = vmatpush2.msra.mxu0 0.0
    %1043 = vmatprep.mubr.f32.mxu0 0.0
    %v1044 = vand.u32 %v704, 4294901760
    %v1045 = vsub.f32 %v704, %v1044
    %1046 = vmatmul.mubr.f32.gmra.mxu0 %v1045
    %v1047 = vpop.f32.mrf.mxu0
    %v1048 = vadd.f32 %v944, %v1047
    %v1049 = vpop.f32.mrf.mxu0
    %1050 = vdwg.mxu0
    %1051 = vmatprep.subr.mxu0 0.0
    %v1052 = vand.u32 %v62, 4294901760
    %1053 = vmatpush1.msra.mxu0 %v1052
    %1054 = vmatprep.subr.mxu0 0.0
    %v1055 = vand.u32 %v61, 4294901760
    %1056 = vmatpush1.msra.mxu0 %v1055
    %1057 = vmatprep.subr.mxu0 0.0
    %v1058 = vand.u32 %v60, 4294901760
    %1059 = vmatpush1.msra.mxu0 %v1058
    %1060 = vmatprep.subr.mxu0 0.0
    %v1061 = vand.u32 %v59, 4294901760
    %1062 = vmatpush1.msra.mxu0 %v1061
    %1063 = vmatprep.subr.mxu0 0.0
    %v1064 = vand.u32 %v58, 4294901760
    %1065 = vmatpush1.msra.mxu0 %v1064
    %1066 = vmatprep.subr.mxu0 0.0
    %v1067 = vand.u32 %v57, 4294901760
    %1068 = vmatpush1.msra.mxu0 %v1067
    %1069 = vmatprep.subr.mxu0 0.0
    %v1070 = vand.u32 %v56, 4294901760
    %1071 = vmatpush1.msra.mxu0 %v1070
    %1072 = vmatprep.subr.mxu0 0.0
    %v1073 = vand.u32 %v55, 4294901760
    %1074 = vmatpush1.msra.mxu0 %v1073
    %1075 = vmatprep.subr.mxu0 0.0
    %v1076 = vand.u32 %v54, 4294901760
    %1077 = vmatpush1.msra.mxu0 %v1076
    %1078 = vmatprep.subr.mxu0 0.0
    %v1079 = vand.u32 %v53, 4294901760
    %1080 = vmatpush1.msra.mxu0 %v1079
    %1081 = vmatprep.subr.mxu0 0.0
    %v1082 = vand.u32 %v52, 4294901760
    %1083 = vmatpush1.msra.mxu0 %v1082
    %1084 = vmatprep.subr.mxu0 0.0
    %v1085 = vand.u32 %v51, 4294901760
    %1086 = vmatpush1.msra.mxu0 %v1085
    %1087 = vmatprep.subr.mxu0 0.0
    %v1088 = vand.u32 %v50, 4294901760
    %1089 = vmatpush1.msra.mxu0 %v1088
    %1090 = vmatprep.subr.mxu0 0.0
    %v1091 = vand.u32 %v49, 4294901760
    %1092 = vmatpush1.msra.mxu0 %v1091
    %1093 = vmatprep.subr.mxu0 0.0
    %v1094 = vand.u32 %v48, 4294901760
    %1095 = vmatpush1.msra.mxu0 %v1094
    %1096 = vmatprep.subr.mxu0 0.0
    %v1097 = vand.u32 %v47, 4294901760
    %1098 = vmatpush1.msra.mxu0 %v1097
    %1099 = vmatprep.subr.mxu0 0.0
    %1100 = vmatpush2.msra.mxu0 0.0
    %1101 = vmatprep.subr.mxu0 0.0
    %1102 = vmatpush2.msra.mxu0 0.0
    %1103 = vmatprep.subr.mxu0 0.0
    %1104 = vmatpush2.msra.mxu0 0.0
    %1105 = vmatprep.subr.mxu0 0.0
    %1106 = vmatpush2.msra.mxu0 0.0
    %1107 = vmatprep.subr.mxu0 0.0
    %1108 = vmatpush2.msra.mxu0 0.0
    %1109 = vmatprep.subr.mxu0 0.0
    %1110 = vmatpush2.msra.mxu0 0.0
    %1111 = vmatprep.subr.mxu0 0.0
    %1112 = vmatpush2.msra.mxu0 0.0
    %1113 = vmatprep.subr.mxu0 0.0
    %1114 = vmatpush2.msra.mxu0 0.0
    %1115 = vmatprep.subr.mxu0 0.0
    %1116 = vmatpush2.msra.mxu0 0.0
    %1117 = vmatprep.subr.mxu0 0.0
    %1118 = vmatpush2.msra.mxu0 0.0
    %1119 = vmatprep.subr.mxu0 0.0
    %1120 = vmatpush2.msra.mxu0 0.0
    %1121 = vmatprep.subr.mxu0 0.0
    %1122 = vmatpush2.msra.mxu0 0.0
    %1123 = vmatprep.subr.mxu0 0.0
    %1124 = vmatpush2.msra.mxu0 0.0
    %1125 = vmatprep.subr.mxu0 0.0
    %1126 = vmatpush2.msra.mxu0 0.0
    %1127 = vmatprep.subr.mxu0 0.0
    %1128 = vmatpush2.msra.mxu0 0.0
    %1129 = vmatprep.subr.mxu0 0.0
    %1130 = vmatpush2.msra.mxu0 0.0
    %1131 = vmatprep.mubr.f32.mxu0 0.0
    %v1132 = vand.u32 %v704, 4294901760
    %v1133 = vsub.f32 %v704, %v1132
    %v1134 = vand.u32 %v1133, 4294901760
    %1135 = vmatmul.mubr.f32.gmra.mxu0 %v1134
    %v1136 = vpop.f32.mrf.mxu0
    %v1137 = vadd.f32 %v1048, %v1136
    %v1138 = vpop.f32.mrf.mxu0
    %1139 = vdwg.mxu0
    %1140 = vmatprep.subr.mxu0 0.0
    %v1141 = vand.u32 %v62, 4294901760
    %v1142 = vsub.f32 %v62, %v1141
    %v1143 = vand.u32 %v1142, 4294901760
    %1144 = vmatpush1.msra.mxu0 %v1143
    %1145 = vmatprep.subr.mxu0 0.0
    %v1146 = vand.u32 %v61, 4294901760
    %v1147 = vsub.f32 %v61, %v1146
    %v1148 = vand.u32 %v1147, 4294901760
    %1149 = vmatpush1.msra.mxu0 %v1148
    %1150 = vmatprep.subr.mxu0 0.0
    %v1151 = vand.u32 %v60, 4294901760
    %v1152 = vsub.f32 %v60, %v1151
    %v1153 = vand.u32 %v1152, 4294901760
    %1154 = vmatpush1.msra.mxu0 %v1153
    %1155 = vmatprep.subr.mxu0 0.0
    %v1156 = vand.u32 %v59, 4294901760
    %v1157 = vsub.f32 %v59, %v1156
    %v1158 = vand.u32 %v1157, 4294901760
    %1159 = vmatpush1.msra.mxu0 %v1158
    %1160 = vmatprep.subr.mxu0 0.0
    %v1161 = vand.u32 %v58, 4294901760
    %v1162 = vsub.f32 %v58, %v1161
    %v1163 = vand.u32 %v1162, 4294901760
    %1164 = vmatpush1.msra.mxu0 %v1163
    %1165 = vmatprep.subr.mxu0 0.0
    %v1166 = vand.u32 %v57, 4294901760
    %v1167 = vsub.f32 %v57, %v1166
    %v1168 = vand.u32 %v1167, 4294901760
    %1169 = vmatpush1.msra.mxu0 %v1168
    %1170 = vmatprep.subr.mxu0 0.0
    %v1171 = vand.u32 %v56, 4294901760
    %v1172 = vsub.f32 %v56, %v1171
    %v1173 = vand.u32 %v1172, 4294901760
    %1174 = vmatpush1.msra.mxu0 %v1173
    %1175 = vmatprep.subr.mxu0 0.0
    %v1176 = vand.u32 %v55, 4294901760
    %v1177 = vsub.f32 %v55, %v1176
    %v1178 = vand.u32 %v1177, 4294901760
    %1179 = vmatpush1.msra.mxu0 %v1178
    %1180 = vmatprep.subr.mxu0 0.0
    %v1181 = vand.u32 %v54, 4294901760
    %v1182 = vsub.f32 %v54, %v1181
    %v1183 = vand.u32 %v1182, 4294901760
    %1184 = vmatpush1.msra.mxu0 %v1183
    %1185 = vmatprep.subr.mxu0 0.0
    %v1186 = vand.u32 %v53, 4294901760
    %v1187 = vsub.f32 %v53, %v1186
    %v1188 = vand.u32 %v1187, 4294901760
    %1189 = vmatpush1.msra.mxu0 %v1188
    %1190 = vmatprep.subr.mxu0 0.0
    %v1191 = vand.u32 %v52, 4294901760
    %v1192 = vsub.f32 %v52, %v1191
    %v1193 = vand.u32 %v1192, 4294901760
    %1194 = vmatpush1.msra.mxu0 %v1193
    %1195 = vmatprep.subr.mxu0 0.0
    %v1196 = vand.u32 %v51, 4294901760
    %v1197 = vsub.f32 %v51, %v1196
    %v1198 = vand.u32 %v1197, 4294901760
    %1199 = vmatpush1.msra.mxu0 %v1198
    %1200 = vmatprep.subr.mxu0 0.0
    %v1201 = vand.u32 %v50, 4294901760
    %v1202 = vsub.f32 %v50, %v1201
    %v1203 = vand.u32 %v1202, 4294901760
    %1204 = vmatpush1.msra.mxu0 %v1203
    %1205 = vmatprep.subr.mxu0 0.0
    %v1206 = vand.u32 %v49, 4294901760
    %v1207 = vsub.f32 %v49, %v1206
    %v1208 = vand.u32 %v1207, 4294901760
    %1209 = vmatpush1.msra.mxu0 %v1208
    %1210 = vmatprep.subr.mxu0 0.0
    %v1211 = vand.u32 %v48, 4294901760
    %v1212 = vsub.f32 %v48, %v1211
    %v1213 = vand.u32 %v1212, 4294901760
    %1214 = vmatpush1.msra.mxu0 %v1213
    %1215 = vmatprep.subr.mxu0 0.0
    %v1216 = vand.u32 %v47, 4294901760
    %v1217 = vsub.f32 %v47, %v1216
    %v1218 = vand.u32 %v1217, 4294901760
    %1219 = vmatpush1.msra.mxu0 %v1218
    %1220 = vmatprep.subr.mxu0 0.0
    %1221 = vmatpush2.msra.mxu0 0.0
    %1222 = vmatprep.subr.mxu0 0.0
    %1223 = vmatpush2.msra.mxu0 0.0
    %1224 = vmatprep.subr.mxu0 0.0
    %1225 = vmatpush2.msra.mxu0 0.0
    %1226 = vmatprep.subr.mxu0 0.0
    %1227 = vmatpush2.msra.mxu0 0.0
    %1228 = vmatprep.subr.mxu0 0.0
    %1229 = vmatpush2.msra.mxu0 0.0
    %1230 = vmatprep.subr.mxu0 0.0
    %1231 = vmatpush2.msra.mxu0 0.0
    %1232 = vmatprep.subr.mxu0 0.0
    %1233 = vmatpush2.msra.mxu0 0.0
    %1234 = vmatprep.subr.mxu0 0.0
    %1235 = vmatpush2.msra.mxu0 0.0
    %1236 = vmatprep.subr.mxu0 0.0
    %1237 = vmatpush2.msra.mxu0 0.0
    %1238 = vmatprep.subr.mxu0 0.0
    %1239 = vmatpush2.msra.mxu0 0.0
    %1240 = vmatprep.subr.mxu0 0.0
    %1241 = vmatpush2.msra.mxu0 0.0
    %1242 = vmatprep.subr.mxu0 0.0
    %1243 = vmatpush2.msra.mxu0 0.0
    %1244 = vmatprep.subr.mxu0 0.0
    %1245 = vmatpush2.msra.mxu0 0.0
    %1246 = vmatprep.subr.mxu0 0.0
    %1247 = vmatpush2.msra.mxu0 0.0
    %1248 = vmatprep.subr.mxu0 0.0
    %1249 = vmatpush2.msra.mxu0 0.0
    %1250 = vmatprep.subr.mxu0 0.0
    %1251 = vmatpush2.msra.mxu0 0.0
    %1252 = vmatprep.mubr.f32.mxu0 0.0
    %v1253 = vand.u32 %v704, 4294901760
    %1254 = vmatmul.mubr.f32.gmra.mxu0 %v1253
    %v1255 = vpop.f32.mrf.mxu0
    %v1256 = vadd.f32 %v1137, %v1255
    %v1257 = vpop.f32.mrf.mxu0
    %1258 = vdwg.mxu0
    %1259 = vmatprep.subr.mxu0 0.0
    %v1260 = vand.u32 %v62, 4294901760
    %1261 = vmatpush1.msra.mxu0 %v1260
    %1262 = vmatprep.subr.mxu0 0.0
    %v1263 = vand.u32 %v61, 4294901760
    %1264 = vmatpush1.msra.mxu0 %v1263
    %1265 = vmatprep.subr.mxu0 0.0
    %v1266 = vand.u32 %v60, 4294901760
    %1267 = vmatpush1.msra.mxu0 %v1266
    %1268 = vmatprep.subr.mxu0 0.0
    %v1269 = vand.u32 %v59, 4294901760
    %1270 = vmatpush1.msra.mxu0 %v1269
    %1271 = vmatprep.subr.mxu0 0.0
    %v1272 = vand.u32 %v58, 4294901760
    %1273 = vmatpush1.msra.mxu0 %v1272
    %1274 = vmatprep.subr.mxu0 0.0
    %v1275 = vand.u32 %v57, 4294901760
    %1276 = vmatpush1.msra.mxu0 %v1275
    %1277 = vmatprep.subr.mxu0 0.0
    %v1278 = vand.u32 %v56, 4294901760
    %1279 = vmatpush1.msra.mxu0 %v1278
    %1280 = vmatprep.subr.mxu0 0.0
    %v1281 = vand.u32 %v55, 4294901760
    %1282 = vmatpush1.msra.mxu0 %v1281
    %1283 = vmatprep.subr.mxu0 0.0
    %v1284 = vand.u32 %v54, 4294901760
    %1285 = vmatpush1.msra.mxu0 %v1284
    %1286 = vmatprep.subr.mxu0 0.0
    %v1287 = vand.u32 %v53, 4294901760
    %1288 = vmatpush1.msra.mxu0 %v1287
    %1289 = vmatprep.subr.mxu0 0.0
    %v1290 = vand.u32 %v52, 4294901760
    %1291 = vmatpush1.msra.mxu0 %v1290
    %1292 = vmatprep.subr.mxu0 0.0
    %v1293 = vand.u32 %v51, 4294901760
    %1294 = vmatpush1.msra.mxu0 %v1293
    %1295 = vmatprep.subr.mxu0 0.0
    %v1296 = vand.u32 %v50, 4294901760
    %1297 = vmatpush1.msra.mxu0 %v1296
    %1298 = vmatprep.subr.mxu0 0.0
    %v1299 = vand.u32 %v49, 4294901760
    %1300 = vmatpush1.msra.mxu0 %v1299
    %1301 = vmatprep.subr.mxu0 0.0
    %v1302 = vand.u32 %v48, 4294901760
    %1303 = vmatpush1.msra.mxu0 %v1302
    %1304 = vmatprep.subr.mxu0 0.0
    %v1305 = vand.u32 %v47, 4294901760
    %1306 = vmatpush1.msra.mxu0 %v1305
    %1307 = vmatprep.subr.mxu0 0.0
    %1308 = vmatpush2.msra.mxu0 0.0
    %1309 = vmatprep.subr.mxu0 0.0
    %1310 = vmatpush2.msra.mxu0 0.0
    %1311 = vmatprep.subr.mxu0 0.0
    %1312 = vmatpush2.msra.mxu0 0.0
    %1313 = vmatprep.subr.mxu0 0.0
    %1314 = vmatpush2.msra.mxu0 0.0
    %1315 = vmatprep.subr.mxu0 0.0
    %1316 = vmatpush2.msra.mxu0 0.0
    %1317 = vmatprep.subr.mxu0 0.0
    %1318 = vmatpush2.msra.mxu0 0.0
    %1319 = vmatprep.subr.mxu0 0.0
    %1320 = vmatpush2.msra.mxu0 0.0
    %1321 = vmatprep.subr.mxu0 0.0
    %1322 = vmatpush2.msra.mxu0 0.0
    %1323 = vmatprep.subr.mxu0 0.0
    %1324 = vmatpush2.msra.mxu0 0.0
    %1325 = vmatprep.subr.mxu0 0.0
    %1326 = vmatpush2.msra.mxu0 0.0
    %1327 = vmatprep.subr.mxu0 0.0
    %1328 = vmatpush2.msra.mxu0 0.0
    %1329 = vmatprep.subr.mxu0 0.0
    %1330 = vmatpush2.msra.mxu0 0.0
    %1331 = vmatprep.subr.mxu0 0.0
    %1332 = vmatpush2.msra.mxu0 0.0
    %1333 = vmatprep.subr.mxu0 0.0
    %1334 = vmatpush2.msra.mxu0 0.0
    %1335 = vmatprep.subr.mxu0 0.0
    %1336 = vmatpush2.msra.mxu0 0.0
    %1337 = vmatprep.subr.mxu0 0.0
    %1338 = vmatpush2.msra.mxu0 0.0
    %1339 = vmatprep.mubr.f32.mxu0 0.0
    %v1340 = vand.u32 %v704, 4294901760
    %1341 = vmatmul.mubr.f32.gmra.mxu0 %v1340
    %v1342 = vpop.f32.mrf.mxu0
    %v1343 = vadd.f32 %v1256, %v1342
    %v1344 = vpop.f32.mrf.mxu0
    %1345 = vdwg.mxu0
    %v1346 = vmul.f32 %v701, 0.03125
    %v1347 = vmul.f32 %v701, %v1346
    %v1348 = vsub.f32 %v1343, %v1347
    %v1349 = vmul.f32 %v1348, 0.032258064
    %v1350 = vmax.f32 %v1349, 0.0
    %v1351 = vrsqrt.pop %v1350
    %v1352 = vmul.f32 %v1350, %v1351
    %vm1353 = vcmp.eq.f32.partialorder %v1350, inf
    %v1354 = vsel %vm1353, %v1350, %v1352
    %vm1355 = vcmp.eq.f32.partialorder %v1350, 0.0
    %v1356 = vand.u32 %v1350, 2147483648
    %v1357 = vsel %vm1355, %v1356, %v1354
    %v1358 = vadd.f32 %v1357, 1e-06
    %v1359 = vrcp.pop %v1358
    %v1360 = vsub.f32 %v44, %v1346
    %v1361 = vmul.f32 %v1360, %v1359
    %v1363 = vlaneseq
    %v1364 = vshrl.u32 %v1363, 7
    %v1365 = vsub.s32 0, %v1364
    %v1366 = vrot.slane %v45, %v1365
    %v1368 = vmul.f32 %v1361, %v1366
    %v1370 = vlaneseq
    %v1371 = vshrl.u32 %v1370, 7
    %v1372 = vsub.s32 0, %v1371
    %v1373 = vrot.slane %v46, %v1372
    %v1375 = vadd.f32 %v1368, %v1373
    %1376 = vst [vmem:[#allocation7] sm:$0xff] %v1375
    // Predicated region
    $region26: #{tpu_custom_call.1} parent=1 // pred_check
      _
    $region27: #{tpu_custom_call.1} parent=1 // pred_check_branch
      %1378 = sbr.rel (0) target = $region29
    $region28: #{tpu_custom_call.1} parent=1 // pred_region
      %s1380 = ssub.s32 128, 128
      %1381 = vsyncadd [#allocation4], %s1380
      %s1383 = sshll.u32 [#allocation7], 4
      %s1384 = int_to_ptr.vmem [resolvable:$true] %s1383
      %1386 = dma.vmem_to_hbm [thread:$0]  %s1384, 128, %s4, [#allocation4]
    $region29: #{tpu_custom_call.1} parent=1 // pred_fallthru
      _
    // Predicated region
    $region30: #{tpu_custom_call.1} parent=1 // pred_check
      _
    $region31: #{tpu_custom_call.1} parent=1 // pred_check_branch
      %1388 = sbr.rel (0) target = $region33
    $region32: #{tpu_custom_call.1} parent=1 // pred_region
      %1389 = dma.done [#allocation4], 128
    $region33: #{tpu_custom_call.1} parent=1 // pred_fallthru
      _
    %1390 = vsyncpa [#allocation3], 1
    %1391 = vsyncpa [#allocation6], 1
    %1392 = vsyncpa [#allocation4], 1

</llo_original>
